<compile_context>
chip_gen: v7x
topology: tpu7x:2x2x1
jax: 0.10.0
libtpu: 0.0.40
codegen_flags: <defaults>
</compile_context>

<pallas_src>
import math

import jax
import jax.numpy as jnp
from jax.experimental import pallas as pl
from jax.experimental.pallas import tpu as pltpu


# ----------------------------------------------------------------------------
# Fused Pallas kernel
# ----------------------------------------------------------------------------
def _glallm_fused_kernel(x_ref, w1_ref, b1_ref, w2_ref, b2_ref,
                         wl_ref, bl_ref, adj_ref, rep_ref,
                         wg_ref, bg_ref, wo_ref, bo_ref, o_ref):
    """Fused GLALLM forward for one tile of tm = tb*N series rows.

    All per-patch linears are packed into block-diagonal weights, so each
    stage is a single flat MXU contraction on a lane-dense (tm, P*D) layout.
    MXU operands are bf16; accumulation and all elementwise math are f32.
    """
    x = x_ref[...]                                              # (tm, P*ps) bf16
    bf = x.dtype

    # ---- global branch (LLM4TS stand-in): per-patch MLP, packed over patches
    h = jnp.dot(x, w1_ref[...], preferred_element_type=jnp.float32) + b1_ref[...]
    h = jax.nn.gelu(h)                                          # f32 (VPU/EUP)
    g = jnp.dot(h.astype(bf), w2_ref[...],
                preferred_element_type=jnp.float32) + b2_ref[...]   # (tm, P*D) f32

    # ---- local branch (STHGNN stand-in): last-patch linear + adjacency mix
    # wl_ref has zero rows except the last patch, so no in-kernel slicing.
    hl = jnp.dot(x, wl_ref[...], preferred_element_type=jnp.float32) + bl_ref[...]
    mixed = jnp.dot(adj_ref[...], hl.astype(bf),
                    preferred_element_type=jnp.float32)         # (tm, D) f32
    local = jax.nn.gelu(mixed)
    # replicate the local embedding across the P patch slots (lane-dense)
    l_rep = jnp.dot(local.astype(bf), rep_ref[...],
                    preferred_element_type=jnp.float32)         # (tm, P*D) f32

    # ---- gated fusion (STA_Fusion stand-in), flat (tm, P*D) layout
    z = g + l_rep
    gate = jax.nn.sigmoid(
        jnp.dot(z.astype(bf), wg_ref[...],
                preferred_element_type=jnp.float32) + bg_ref[...])
    fused = gate * g + (1.0 - gate) * l_rep                     # f32

    # ---- output head, padded to a lane-dense (128-wide) store
    out = jnp.dot(fused.astype(bf), wo_ref[...],
                  preferred_element_type=jnp.float32) + bo_ref[...]
    o_ref[...] = out.astype(o_ref.dtype)


# ----------------------------------------------------------------------------
# Wrapper: layout plumbing + pallas_call
# ----------------------------------------------------------------------------
def _pick_batch_tile(B, N, max_rows=1024):
    """Largest divisor tb of B with tb*N rows/tile <= max_rows, preferring a
    row count that is a multiple of 8 sublanes (BlockSpec requirement when
    the tile is not the full array).  Falls back to the full batch."""
    cap = max(1, max_rows // max(N, 1))
    for tb in range(min(B, cap), 0, -1):
        if B % tb == 0 and (tb == B or (tb * N) % 8 == 0):
            return tb
    return B


def make_patches(X, patch_size, stride):
    # X: (B, T, N) -> (B, N, patch_num, patch_size)  (torch .unfold semantics)
    x = jnp.transpose(X, (0, 2, 1))                      # (B, N, T)
    T = x.shape[-1]
    P = (T - patch_size) // stride + 1
    idx = stride * jnp.arange(P)[:, None] + jnp.arange(patch_size)[None, :]
    return x[:, :, idx]                                  # (B, N, P, patch_size)


def glallm_forward(params, X, X_mark, cfg):
    del X_mark  # unused by the reference forward
    B, T, N = X.shape
    ps, st, D = cfg.patch_size, cfg.stride, cfg.fused_embed_dim
    pred = cfg.pred_len
    P = (T - ps) // st + 1            # derived from the actual T of X
    Kin, Dout = P * ps, P * D
    M = B * N
    bf = jnp.bfloat16

    # ---- patching + lane-dense flattening (wrapper-side layout plumbing) ----
    x = make_patches(X, ps, st)                          # (B, N, P, ps)
    x_flat = x.reshape(M, Kin).astype(bf)                # (M, P*ps)

    # ---- pack per-patch weights into block-diagonal / padded matrices ------
    eye_p = jnp.eye(P, dtype=jnp.float32)
    w1_blk = jnp.kron(eye_p, params["w_g1"]).astype(bf)          # (P*ps, P*D)
    w2_blk = jnp.kron(eye_p, params["w_g2"]).astype(bf)          # (P*D , P*D)
    wg_blk = jnp.kron(eye_p, params["w_gate"]).astype(bf)        # (P*D , P*D)
    b1_t = jnp.tile(params["b_g1"], (1, P))                      # (1, P*D) f32
    b2_t = jnp.tile(params["b_g2"], (1, P))
    bg_t = jnp.tile(params["b_gate"], (1, P))
    # local branch only sees the last patch -> zero-padded rows (K = P*ps)
    wl_blk = jnp.zeros((Kin, D), jnp.float32)
    wl_blk = wl_blk.at[(P - 1) * ps:, :].set(params["w_l"]).astype(bf)
    bl = params["b_l"]                                           # (1, D) f32
    # replicate matrix (D, P*D): broadcasts the local embed across patch slots
    rep = jnp.tile(jnp.eye(D, dtype=jnp.float32), (1, P)).astype(bf)
    # output head padded to a lane-dense width (avoids masked vst on pred=8)
    pred_pad = -(-pred // 128) * 128
    wo_pad = jnp.zeros((Dout, pred_pad), jnp.float32)
    wo_pad = wo_pad.at[:, :pred].set(params["w_out"]).astype(bf)
    bo_pad = jnp.zeros((1, pred_pad), jnp.float32).at[:, :pred].set(params["b_out"])

    # ---- row tiling: whole batches per tile so the adjacency mix is local --
    tb = _pick_batch_tile(B, N)
    tm = tb * N
    adj_blk = jnp.kron(jnp.eye(tb, dtype=jnp.float32), params["adj"]).astype(bf)
    num_tiles = M // tm

    # ---- advisory cost estimate --------------------------------------------
    flops = 2 * M * (Kin * Dout + Dout * Dout + Kin * D + tm * D
                     + D * Dout + Dout * Dout + Dout * pred_pad)
    transcendentals = M * (2 * Dout + D)           # gelu, gelu, sigmoid
    w_bytes = 2 * (Kin * Dout + 2 * Dout * Dout + Kin * D + tm * tm
                   + D * Dout + Dout * pred_pad)
    b_bytes = 4 * (3 * Dout + D + pred_pad)
    bytes_accessed = (M * Kin * 2 + M * pred_pad * 4
                      + num_tiles * (w_bytes + b_bytes))
    cost = pl.CostEstimate(flops=int(flops),
                           transcendentals=int(transcendentals),
                           bytes_accessed=int(bytes_accessed))

    out_pad = pl.pallas_call(
        _glallm_fused_kernel,
        out_shape=jax.ShapeDtypeStruct((M, pred_pad), jnp.float32),
        grid=(num_tiles,),
        in_specs=[
            pl.BlockSpec((tm, Kin), lambda i: (i, 0)),        # x rows
            pl.BlockSpec((Kin, Dout), lambda i: (0, 0)),      # w1 block-diag
            pl.BlockSpec((1, Dout), lambda i: (0, 0)),        # b1 tiled
            pl.BlockSpec((Dout, Dout), lambda i: (0, 0)),     # w2 block-diag
            pl.BlockSpec((1, Dout), lambda i: (0, 0)),        # b2 tiled
            pl.BlockSpec((Kin, D), lambda i: (0, 0)),         # w_l (zero-padded)
            pl.BlockSpec((1, D), lambda i: (0, 0)),           # b_l
            pl.BlockSpec((tm, tm), lambda i: (0, 0)),         # block-diag adj
            pl.BlockSpec((D, Dout), lambda i: (0, 0)),        # replicate matrix
            pl.BlockSpec((Dout, Dout), lambda i: (0, 0)),     # w_gate block-diag
            pl.BlockSpec((1, Dout), lambda i: (0, 0)),        # b_gate tiled
            pl.BlockSpec((Dout, pred_pad), lambda i: (0, 0)), # w_out padded
            pl.BlockSpec((1, pred_pad), lambda i: (0, 0)),    # b_out padded
        ],
        out_specs=pl.BlockSpec((tm, pred_pad), lambda i: (i, 0)),
        compiler_params=pltpu.CompilerParams(
            dimension_semantics=("parallel",),
            # Working set per tile is a few hundred KiB here; 32 MiB is safe
            # on v5e/v6e (128 MiB VMEM) and v7x (64 MiB VMEM).  Re-derive the
            # row tile if the model is scaled up.
            vmem_limit_bytes=32 * 1024 * 1024,
        ),
        cost_estimate=cost,
    )(x_flat, w1_blk, b1_t, w2_blk, b2_t, wl_blk, bl, adj_blk, rep,
      wg_blk, bg_t, wo_pad, bo_pad)

    out = out_pad[:, :pred].reshape(B, N, pred)
    return jnp.transpose(out, (0, 2, 1))                 # (B, pred_len, N)


# ----------------------------------------------------------------------------
# Model glue (config, params) and a pure-JAX reference
# ----------------------------------------------------------------------------
class Configs:
    seq_len = 16
    pred_len = 8
    patch_size = 4
    stride = 4
    enc_in = 4            # N (number of series)
    fused_embed_dim = 32  # D


def init_params(cfg, key):
    ps, D = cfg.patch_size, cfg.fused_embed_dim
    P = (cfg.seq_len - ps) // cfg.stride + 1
    N, pred = cfg.enc_in, cfg.pred_len
    ks = jax.random.split(key, 8)
    scale = lambda fan_in: 1.0 / jnp.sqrt(jnp.float32(fan_in))
    params = {
        # global branch (LLM4TS stand-in): patch_size -> D -> D MLP
        "w_g1": jax.random.normal(ks[0], (ps, D), jnp.float32) * scale(ps),
        "b_g1": jnp.zeros((1, D), jnp.float32),
        "w_g2": jax.random.normal(ks[1], (D, D), jnp.float32) * scale(D),
        "b_g2": jnp.zeros((1, D), jnp.float32),
        # local branch (STHGNN stand-in): per-node linear + graph mixing
        "w_l": jax.random.normal(ks[2], (ps, D), jnp.float32) * scale(ps),
        "b_l": jnp.zeros((1, D), jnp.float32),
        # fusion (STA_Fusion stand-in): gating projection
        "w_gate": jax.random.normal(ks[3], (D, D), jnp.float32) * scale(D),
        "b_gate": jnp.zeros((1, D), jnp.float32),
        # output head: Linear(D * patch_num -> pred_len)
        "w_out": jax.random.normal(ks[4], (D * P, pred), jnp.float32) * scale(D * P),
        "b_out": jnp.zeros((1, pred), jnp.float32),
    }
    # ring + self-loop adjacency, row-normalized (deterministic)
    adj = jnp.eye(N, dtype=jnp.float32)
    adj = adj + jnp.roll(jnp.eye(N, dtype=jnp.float32), 1, axis=1)
    adj = adj + jnp.roll(jnp.eye(N, dtype=jnp.float32), -1, axis=1)
    params["adj"] = adj / jnp.sum(adj, axis=1, keepdims=True)
    return params


def glallm_reference(params, X, X_mark, cfg):
    """Pure-JAX reference mirroring the kernel's bf16-operand numerics."""
    del X_mark
    B, T, N = X.shape
    ps, st, D = cfg.patch_size, cfg.stride, cfg.fused_embed_dim
    P = (T - ps) // st + 1
    bf, f32 = jnp.bfloat16, jnp.float32

    x = make_patches(X, ps, st).astype(bf)                    # (B, N, P, ps)

    h = jnp.einsum("bnps,sd->bnpd", x, params["w_g1"].astype(bf),
                   preferred_element_type=f32) + params["b_g1"][0]
    h = jax.nn.gelu(h)
    g = jnp.einsum("bnpd,de->bnpe", h.astype(bf), params["w_g2"].astype(bf),
                   preferred_element_type=f32) + params["b_g2"][0]

    xl = x[:, :, -1, :]                                       # (B, N, ps)
    hl = jnp.einsum("bns,sd->bnd", xl, params["w_l"].astype(bf),
                    preferred_element_type=f32) + params["b_l"][0]
    local = jax.nn.gelu(jnp.einsum("mn,bnd->bmd", params["adj"].astype(bf),
                                   hl.astype(bf), preferred_element_type=f32))
    local = local.astype(bf).astype(f32)   # kernel replicates via bf16 MXU
    lb = local[:, :, None, :]

    z = g + lb
    gate = jax.nn.sigmoid(
        jnp.einsum("bnpd,de->bnpe", z.astype(bf), params["w_gate"].astype(bf),
                   preferred_element_type=f32) + params["b_gate"][0])
    fused = gate * g + (1.0 - gate) * lb
    out = jnp.einsum("bnk,kp->bnp", fused.reshape(B, N, P * D).astype(bf),
                     params["w_out"].astype(bf),
                     preferred_element_type=f32) + params["b_out"][0]
    return jnp.transpose(out, (0, 2, 1))


if __name__ == "__main__":
    cfg = Configs()
    B = 2

    key = jax.random.PRNGKey(0)
    k_p, k_x, k_m = jax.random.split(key, 3)
    params = init_params(cfg, k_p)
    X = jax.random.normal(k_x, (B, cfg.seq_len, cfg.enc_in), jnp.float32)
    X_mark = jax.random.normal(k_m, (B, cfg.seq_len, 4), jnp.float32)  # unused

    fwd = jax.jit(lambda p, x, xm: glallm_forward(p, x, xm, cfg))
    out = jax.block_until_ready(fwd(params, X, X_mark))

    ref = jax.block_until_ready(glallm_reference(params, X, X_mark, cfg))
    assert out.shape == (B, cfg.pred_len, cfg.enc_in), out.shape
    max_err = float(jnp.max(jnp.abs(out - ref)))
    assert jnp.allclose(out, ref, rtol=1e-2, atol=1e-2), max_err
    print("KERNEL_OK")
</pallas_src>

<mosaic_0001>
module attributes {stable_mosaic.version = 11 : i64} {
  func.func @_glallm_fused_kernel(%arg0: i32, %arg1: memref<8x16xbf16, #tpu.memory_space<vmem>>, %arg2: memref<16x128xbf16, #tpu.memory_space<vmem>>, %arg3: memref<1x128xf32, #tpu.memory_space<vmem>>, %arg4: memref<128x128xbf16, #tpu.memory_space<vmem>>, %arg5: memref<1x128xf32, #tpu.memory_space<vmem>>, %arg6: memref<16x32xbf16, #tpu.memory_space<vmem>>, %arg7: memref<1x32xf32, #tpu.memory_space<vmem>>, %arg8: memref<8x8xbf16, #tpu.memory_space<vmem>>, %arg9: memref<32x128xbf16, #tpu.memory_space<vmem>>, %arg10: memref<128x128xbf16, #tpu.memory_space<vmem>>, %arg11: memref<1x128xf32, #tpu.memory_space<vmem>>, %arg12: memref<128x128xbf16, #tpu.memory_space<vmem>>, %arg13: memref<1x128xf32, #tpu.memory_space<vmem>>, %arg14: memref<8x128xf32, #tpu.memory_space<vmem>>) attributes {dimension_semantics = [#tpu.dimension_semantics<parallel>], iteration_bounds = array<i64: 1>, scalar_prefetch = 0 : i64, scratch_operands = 0 : i64, tpu.core_type = #tpu.core_type<tc>, window_params = [{transform_indices = @transform_0, window_bounds = array<i64: 8, 16>}, {pipeline_mode = #tpu.pipeline_mode<synchronous>, transform_indices = @transform_1, window_bounds = array<i64: 16, 128>}, {pipeline_mode = #tpu.pipeline_mode<synchronous>, transform_indices = @transform_2, window_bounds = array<i64: 1, 128>}, {pipeline_mode = #tpu.pipeline_mode<synchronous>, transform_indices = @transform_3, window_bounds = array<i64: 128, 128>}, {pipeline_mode = #tpu.pipeline_mode<synchronous>, transform_indices = @transform_4, window_bounds = array<i64: 1, 128>}, {pipeline_mode = #tpu.pipeline_mode<synchronous>, transform_indices = @transform_5, window_bounds = array<i64: 16, 32>}, {pipeline_mode = #tpu.pipeline_mode<synchronous>, transform_indices = @transform_6, window_bounds = array<i64: 1, 32>}, {pipeline_mode = #tpu.pipeline_mode<synchronous>, transform_indices = @transform_7, window_bounds = array<i64: 8, 8>}, {pipeline_mode = #tpu.pipeline_mode<synchronous>, transform_indices = @transform_8, window_bounds = array<i64: 32, 128>}, {pipeline_mode = #tpu.pipeline_mode<synchronous>, transform_indices = @transform_9, window_bounds = array<i64: 128, 128>}, {pipeline_mode = #tpu.pipeline_mode<synchronous>, transform_indices = @transform_10, window_bounds = array<i64: 1, 128>}, {pipeline_mode = #tpu.pipeline_mode<synchronous>, transform_indices = @transform_11, window_bounds = array<i64: 128, 128>}, {pipeline_mode = #tpu.pipeline_mode<synchronous>, transform_indices = @transform_12, window_bounds = array<i64: 1, 128>}, {transform_indices = @transform_13, window_bounds = array<i64: 8, 128>}]} {
    %c0 = arith.constant 0 : index
    %c0_0 = arith.constant 0 : index
    %0 = vector.load %arg1[%c0, %c0_0] : memref<8x16xbf16, #tpu.memory_space<vmem>>, vector<8x16xbf16>
    %c0_1 = arith.constant 0 : index
    %c0_2 = arith.constant 0 : index
    %1 = vector.load %arg2[%c0_1, %c0_2] : memref<16x128xbf16, #tpu.memory_space<vmem>>, vector<16x128xbf16>
    %cst = arith.constant dense<0.000000e+00> : vector<8x128xf32>
    %2 = tpu.matmul %0, %1, %cst {dimension_numbers = #tpu.dot_dimension_numbers<[1], [0], [0], [1], [0, 0, 1, 1], [], []>} : vector<8x16xbf16>, vector<16x128xbf16>, vector<8x128xf32> -> vector<8x128xf32>
    %c0_3 = arith.constant 0 : index
    %c0_4 = arith.constant 0 : index
    %3 = vector.load %arg3[%c0_3, %c0_4] : memref<1x128xf32, #tpu.memory_space<vmem>>, vector<1x128xf32>
    %4 = vector.broadcast %3 : vector<1x128xf32> to vector<8x128xf32>
    %5 = arith.addf %2, %4 : vector<8x128xf32>
    %6 = arith.mulf %5, %5 : vector<8x128xf32>
    %7 = arith.mulf %5, %6 : vector<8x128xf32>
    %cst_5 = arith.constant 4.471500e-02 : f32
    %8 = vector.broadcast %cst_5 : f32 to vector<8x128xf32>
    %9 = arith.mulf %8, %7 : vector<8x128xf32>
    %10 = arith.addf %5, %9 : vector<8x128xf32>
    %cst_6 = arith.constant 0.797884583 : f32
    %11 = vector.broadcast %cst_6 : f32 to vector<8x128xf32>
    %12 = arith.mulf %11, %10 : vector<8x128xf32>
    %13 = math.tanh %12 : vector<8x128xf32>
    %cst_7 = arith.constant 1.000000e+00 : f32
    %14 = vector.broadcast %cst_7 : f32 to vector<8x128xf32>
    %15 = arith.addf %14, %13 : vector<8x128xf32>
    %cst_8 = arith.constant 5.000000e-01 : f32
    %16 = vector.broadcast %cst_8 : f32 to vector<8x128xf32>
    %17 = arith.mulf %16, %15 : vector<8x128xf32>
    %18 = arith.mulf %5, %17 : vector<8x128xf32>
    %19 = arith.truncf %18 : vector<8x128xf32> to vector<8x128xbf16>
    %c0_9 = arith.constant 0 : index
    %c0_10 = arith.constant 0 : index
    %20 = vector.load %arg4[%c0_9, %c0_10] : memref<128x128xbf16, #tpu.memory_space<vmem>>, vector<128x128xbf16>
    %cst_11 = arith.constant dense<0.000000e+00> : vector<8x128xf32>
    %21 = tpu.matmul %19, %20, %cst_11 {dimension_numbers = #tpu.dot_dimension_numbers<[1], [0], [0], [1], [0, 0, 1, 1], [], []>} : vector<8x128xbf16>, vector<128x128xbf16>, vector<8x128xf32> -> vector<8x128xf32>
    %c0_12 = arith.constant 0 : index
    %c0_13 = arith.constant 0 : index
    %22 = vector.load %arg5[%c0_12, %c0_13] : memref<1x128xf32, #tpu.memory_space<vmem>>, vector<1x128xf32>
    %23 = vector.broadcast %22 : vector<1x128xf32> to vector<8x128xf32>
    %24 = arith.addf %21, %23 : vector<8x128xf32>
    %c0_14 = arith.constant 0 : index
    %c0_15 = arith.constant 0 : index
    %25 = vector.load %arg6[%c0_14, %c0_15] : memref<16x32xbf16, #tpu.memory_space<vmem>>, vector<16x32xbf16>
    %cst_16 = arith.constant dense<0.000000e+00> : vector<8x32xf32>
    %26 = tpu.matmul %0, %25, %cst_16 {dimension_numbers = #tpu.dot_dimension_numbers<[1], [0], [0], [1], [0, 0, 1, 1], [], []>} : vector<8x16xbf16>, vector<16x32xbf16>, vector<8x32xf32> -> vector<8x32xf32>
    %c0_17 = arith.constant 0 : index
    %c0_18 = arith.constant 0 : index
    %27 = vector.load %arg7[%c0_17, %c0_18] : memref<1x32xf32, #tpu.memory_space<vmem>>, vector<1x32xf32>
    %28 = vector.broadcast %27 : vector<1x32xf32> to vector<8x32xf32>
    %29 = arith.addf %26, %28 : vector<8x32xf32>
    %c0_19 = arith.constant 0 : index
    %c0_20 = arith.constant 0 : index
    %30 = vector.load %arg8[%c0_19, %c0_20] : memref<8x8xbf16, #tpu.memory_space<vmem>>, vector<8x8xbf16>
    %31 = arith.truncf %29 : vector<8x32xf32> to vector<8x32xbf16>
    %cst_21 = arith.constant dense<0.000000e+00> : vector<8x32xf32>
    %32 = tpu.matmul %30, %31, %cst_21 {dimension_numbers = #tpu.dot_dimension_numbers<[1], [0], [0], [1], [0, 0, 1, 1], [], []>} : vector<8x8xbf16>, vector<8x32xbf16>, vector<8x32xf32> -> vector<8x32xf32>
    %33 = arith.mulf %32, %32 : vector<8x32xf32>
    %34 = arith.mulf %32, %33 : vector<8x32xf32>
    %cst_22 = arith.constant 4.471500e-02 : f32
    %35 = vector.broadcast %cst_22 : f32 to vector<8x32xf32>
    %36 = arith.mulf %35, %34 : vector<8x32xf32>
    %37 = arith.addf %32, %36 : vector<8x32xf32>
    %cst_23 = arith.constant 0.797884583 : f32
    %38 = vector.broadcast %cst_23 : f32 to vector<8x32xf32>
    %39 = arith.mulf %38, %37 : vector<8x32xf32>
    %40 = math.tanh %39 : vector<8x32xf32>
    %cst_24 = arith.constant 1.000000e+00 : f32
    %41 = vector.broadcast %cst_24 : f32 to vector<8x32xf32>
    %42 = arith.addf %41, %40 : vector<8x32xf32>
    %cst_25 = arith.constant 5.000000e-01 : f32
    %43 = vector.broadcast %cst_25 : f32 to vector<8x32xf32>
    %44 = arith.mulf %43, %42 : vector<8x32xf32>
    %45 = arith.mulf %32, %44 : vector<8x32xf32>
    %46 = arith.truncf %45 : vector<8x32xf32> to vector<8x32xbf16>
    %c0_26 = arith.constant 0 : index
    %c0_27 = arith.constant 0 : index
    %47 = vector.load %arg9[%c0_26, %c0_27] : memref<32x128xbf16, #tpu.memory_space<vmem>>, vector<32x128xbf16>
    %cst_28 = arith.constant dense<0.000000e+00> : vector<8x128xf32>
    %48 = tpu.matmul %46, %47, %cst_28 {dimension_numbers = #tpu.dot_dimension_numbers<[1], [0], [0], [1], [0, 0, 1, 1], [], []>} : vector<8x32xbf16>, vector<32x128xbf16>, vector<8x128xf32> -> vector<8x128xf32>
    %49 = arith.addf %24, %48 : vector<8x128xf32>
    %50 = arith.truncf %49 : vector<8x128xf32> to vector<8x128xbf16>
    %c0_29 = arith.constant 0 : index
    %c0_30 = arith.constant 0 : index
    %51 = vector.load %arg10[%c0_29, %c0_30] : memref<128x128xbf16, #tpu.memory_space<vmem>>, vector<128x128xbf16>
    %cst_31 = arith.constant dense<0.000000e+00> : vector<8x128xf32>
    %52 = tpu.matmul %50, %51, %cst_31 {dimension_numbers = #tpu.dot_dimension_numbers<[1], [0], [0], [1], [0, 0, 1, 1], [], []>} : vector<8x128xbf16>, vector<128x128xbf16>, vector<8x128xf32> -> vector<8x128xf32>
    %c0_32 = arith.constant 0 : index
    %c0_33 = arith.constant 0 : index
    %53 = vector.load %arg11[%c0_32, %c0_33] : memref<1x128xf32, #tpu.memory_space<vmem>>, vector<1x128xf32>
    %54 = vector.broadcast %53 : vector<1x128xf32> to vector<8x128xf32>
    %55 = arith.addf %52, %54 : vector<8x128xf32>
    %56 = arith.negf %55 : vector<8x128xf32>
    %57 = math.exp %56 : vector<8x128xf32>
    %cst_34 = arith.constant 1.000000e+00 : f32
    %58 = vector.broadcast %cst_34 : f32 to vector<8x128xf32>
    %59 = arith.addf %58, %57 : vector<8x128xf32>
    %60 = arith.divf %58, %59 : vector<8x128xf32>
    %61 = arith.mulf %60, %24 : vector<8x128xf32>
    %cst_35 = arith.constant 1.000000e+00 : f32
    %62 = vector.broadcast %cst_35 : f32 to vector<8x128xf32>
    %63 = arith.subf %62, %60 : vector<8x128xf32>
    %64 = arith.mulf %63, %48 : vector<8x128xf32>
    %65 = arith.addf %61, %64 : vector<8x128xf32>
    %66 = arith.truncf %65 : vector<8x128xf32> to vector<8x128xbf16>
    %c0_36 = arith.constant 0 : index
    %c0_37 = arith.constant 0 : index
    %67 = vector.load %arg12[%c0_36, %c0_37] : memref<128x128xbf16, #tpu.memory_space<vmem>>, vector<128x128xbf16>
    %cst_38 = arith.constant dense<0.000000e+00> : vector<8x128xf32>
    %68 = tpu.matmul %66, %67, %cst_38 {dimension_numbers = #tpu.dot_dimension_numbers<[1], [0], [0], [1], [0, 0, 1, 1], [], []>} : vector<8x128xbf16>, vector<128x128xbf16>, vector<8x128xf32> -> vector<8x128xf32>
    %c0_39 = arith.constant 0 : index
    %c0_40 = arith.constant 0 : index
    %69 = vector.load %arg13[%c0_39, %c0_40] : memref<1x128xf32, #tpu.memory_space<vmem>>, vector<1x128xf32>
    %70 = vector.broadcast %69 : vector<1x128xf32> to vector<8x128xf32>
    %71 = arith.addf %68, %70 : vector<8x128xf32>
    %c0_41 = arith.constant 0 : index
    %c0_42 = arith.constant 0 : index
    %72 = vector.load %arg14[%c0_41, %c0_42] : memref<8x128xf32, #tpu.memory_space<vmem>>, vector<8x128xf32>
    tpu.vector_store %arg14[%c0_41, %c0_42], %71 {strides = array<i32>} : memref<8x128xf32, #tpu.memory_space<vmem>>, vector<8x128xf32>,
    return
  }
  func.func @transform_0(%arg0: i32) -> (i32, i32) {
    %c0_i32 = arith.constant 0 : i32
    %c0_i32_0 = arith.constant 0 : i32
    return %arg0, %c0_i32 : i32, i32
  }
  func.func @transform_1(%arg0: i32) -> (i32, i32) {
    %c0_i32 = arith.constant 0 : i32
    %c0_i32_0 = arith.constant 0 : i32
    %c0_i32_1 = arith.constant 0 : i32
    return %c0_i32, %c0_i32_0 : i32, i32
  }
  func.func @transform_2(%arg0: i32) -> (i32, i32) {
    %c0_i32 = arith.constant 0 : i32
    %c0_i32_0 = arith.constant 0 : i32
    %c0_i32_1 = arith.constant 0 : i32
    return %c0_i32, %c0_i32_0 : i32, i32
  }
  func.func @transform_3(%arg0: i32) -> (i32, i32) {
    %c0_i32 = arith.constant 0 : i32
    %c0_i32_0 = arith.constant 0 : i32
    %c0_i32_1 = arith.constant 0 : i32
    return %c0_i32, %c0_i32_0 : i32, i32
  }
  func.func @transform_4(%arg0: i32) -> (i32, i32) {
    %c0_i32 = arith.constant 0 : i32
    %c0_i32_0 = arith.constant 0 : i32
    %c0_i32_1 = arith.constant 0 : i32
    return %c0_i32, %c0_i32_0 : i32, i32
  }
  func.func @transform_5(%arg0: i32) -> (i32, i32) {
    %c0_i32 = arith.constant 0 : i32
    %c0_i32_0 = arith.constant 0 : i32
    %c0_i32_1 = arith.constant 0 : i32
    return %c0_i32, %c0_i32_0 : i32, i32
  }
  func.func @transform_6(%arg0: i32) -> (i32, i32) {
    %c0_i32 = arith.constant 0 : i32
    %c0_i32_0 = arith.constant 0 : i32
    %c0_i32_1 = arith.constant 0 : i32
    return %c0_i32, %c0_i32_0 : i32, i32
  }
  func.func @transform_7(%arg0: i32) -> (i32, i32) {
    %c0_i32 = arith.constant 0 : i32
    %c0_i32_0 = arith.constant 0 : i32
    %c0_i32_1 = arith.constant 0 : i32
    return %c0_i32, %c0_i32_0 : i32, i32
  }
  func.func @transform_8(%arg0: i32) -> (i32, i32) {
    %c0_i32 = arith.constant 0 : i32
    %c0_i32_0 = arith.constant 0 : i32
    %c0_i32_1 = arith.constant 0 : i32
    return %c0_i32, %c0_i32_0 : i32, i32
  }
  func.func @transform_9(%arg0: i32) -> (i32, i32) {
    %c0_i32 = arith.constant 0 : i32
    %c0_i32_0 = arith.constant 0 : i32
    %c0_i32_1 = arith.constant 0 : i32
    return %c0_i32, %c0_i32_0 : i32, i32
  }
  func.func @transform_10(%arg0: i32) -> (i32, i32) {
    %c0_i32 = arith.constant 0 : i32
    %c0_i32_0 = arith.constant 0 : i32
    %c0_i32_1 = arith.constant 0 : i32
    return %c0_i32, %c0_i32_0 : i32, i32
  }
  func.func @transform_11(%arg0: i32) -> (i32, i32) {
    %c0_i32 = arith.constant 0 : i32
    %c0_i32_0 = arith.constant 0 : i32
    %c0_i32_1 = arith.constant 0 : i32
    return %c0_i32, %c0_i32_0 : i32, i32
  }
  func.func @transform_12(%arg0: i32) -> (i32, i32) {
    %c0_i32 = arith.constant 0 : i32
    %c0_i32_0 = arith.constant 0 : i32
    %c0_i32_1 = arith.constant 0 : i32
    return %c0_i32, %c0_i32_0 : i32, i32
  }
  func.func @transform_13(%arg0: i32) -> (i32, i32) {
    %c0_i32 = arith.constant 0 : i32
    %c0_i32_0 = arith.constant 0 : i32
    return %arg0, %c0_i32 : i32, i32
  }
}

</mosaic_0001>

<llo_original>
// kernel: _lambda_.1
$region0: #{_lambda_.1}
  #allocation0 [shape = 'u32[]', space=smem, size = 0x4, offset = 0x4, fixed_abs, tag = 'smem constant byte address 0x4 - core index']
  #allocation1 [shape = 'u32[144,128]{1,0:T(1,128)}', space=vmem, size = 0x12000, scoped, tag = 'internal scratch']
  %s0 = inlined_call_operand.vmem [shape: bf16[8,16], index: 0, kind: input, shape index: {}]
  %s1 = inlined_call_operand.vmem [shape: bf16[16,128], index: 1, kind: input, shape index: {}]
  %s2 = inlined_call_operand.vmem [shape: f32[1,128], index: 2, kind: input, shape index: {}]
  %s3 = inlined_call_operand.vmem [shape: bf16[128,128], index: 3, kind: input, shape index: {}]
  %s4 = inlined_call_operand.vmem [shape: f32[1,128], index: 4, kind: input, shape index: {}]
  %s5 = inlined_call_operand.vmem [shape: bf16[16,32], index: 5, kind: input, shape index: {}]
  %s6 = inlined_call_operand.vmem [shape: f32[1,32], index: 6, kind: input, shape index: {}]
  %s7 = inlined_call_operand.vmem [shape: bf16[8,8], index: 7, kind: input, shape index: {}]
  %s8 = inlined_call_operand.vmem [shape: bf16[32,128], index: 8, kind: input, shape index: {}]
  %s9 = inlined_call_operand.vmem [shape: bf16[128,128], index: 9, kind: input, shape index: {}]
  %s10 = inlined_call_operand.vmem [shape: f32[1,128], index: 10, kind: input, shape index: {}]
  %s11 = inlined_call_operand.vmem [shape: bf16[128,128], index: 11, kind: input, shape index: {}]
  %s12 = inlined_call_operand.vmem [shape: f32[1,128], index: 12, kind: input, shape index: {}]
  %s13 = inlined_call_operand.hbm [shape: f32[8,128], index: 13, kind: output, shape index: {}]
  %s14 = sld [smem:[#allocation0]]
  $region62: #{_lambda_.1} parent=0
    _
  %s16 = ssub.s32 1, %s14
  %s17 = scalar_select 0, %s16, %s14
  $region1: #{_lambda_.1} parent=0
    #allocation2 [shape = 'u8[4096]{0}', space=vmem, size = 0x1000, scoped, tag = 'output window, operand 0, single buffered']
    #allocation3 [shape = 's32[1]{0}', space=sflag, size = 0x4, scoped, tag = 'scoped memory for _lambda_.1']
    %18 = vsyncpa [#allocation3], 0
    // Predicated region
    $region2: #{_lambda_.1} parent=1 // pred_check
      _
    $region3: #{_lambda_.1} parent=1 // pred_check_branch
      %20 = sbr.rel (0) target = $region5
    $region4: #{_lambda_.1} parent=1 // pred_region
      _
    $region5: #{_lambda_.1} parent=1 // pred_fallthru
      _
    // Predicated region
    $region6: #{_lambda_.1} parent=1 // pred_check
      _
    $region7: #{_lambda_.1} parent=1 // pred_check_branch
      %22 = sbr.rel (0) target = $region9
    $region8: #{_lambda_.1} parent=1 // pred_region
      _
    $region9: #{_lambda_.1} parent=1 // pred_fallthru
      _
    // Predicated region
    $region10: #{_lambda_.1} parent=1 // pred_check
      _
    $region11: #{_lambda_.1} parent=1 // pred_check_branch
      %24 = sbr.rel (0) target = $region13
    $region12: #{_lambda_.1} parent=1 // pred_region
      _
    $region13: #{_lambda_.1} parent=1 // pred_fallthru
      _
    // Predicated region
    $region14: #{_lambda_.1} parent=1 // pred_check
      _
    $region15: #{_lambda_.1} parent=1 // pred_check_branch
      %26 = sbr.rel (0) target = $region17
    $region16: #{_lambda_.1} parent=1 // pred_region
      _
    $region17: #{_lambda_.1} parent=1 // pred_fallthru
      _
    // Predicated region
    $region18: #{_lambda_.1} parent=1 // pred_check
      _
    $region19: #{_lambda_.1} parent=1 // pred_check_branch
      %28 = sbr.rel (0) target = $region21
    $region20: #{_lambda_.1} parent=1 // pred_region
      _
    $region21: #{_lambda_.1} parent=1 // pred_fallthru
      _
    // Predicated region
    $region22: #{_lambda_.1} parent=1 // pred_check
      _
    $region23: #{_lambda_.1} parent=1 // pred_check_branch
      %30 = sbr.rel (0) target = $region25
    $region24: #{_lambda_.1} parent=1 // pred_region
      _
    $region25: #{_lambda_.1} parent=1 // pred_fallthru
      _
    // Predicated region
    $region26: #{_lambda_.1} parent=1 // pred_check
      _
    $region27: #{_lambda_.1} parent=1 // pred_check_branch
      %32 = sbr.rel (0) target = $region29
    $region28: #{_lambda_.1} parent=1 // pred_region
      _
    $region29: #{_lambda_.1} parent=1 // pred_fallthru
      _
    // Predicated region
    $region30: #{_lambda_.1} parent=1 // pred_check
      _
    $region31: #{_lambda_.1} parent=1 // pred_check_branch
      %34 = sbr.rel (0) target = $region33
    $region32: #{_lambda_.1} parent=1 // pred_region
      _
    $region33: #{_lambda_.1} parent=1 // pred_fallthru
      _
    // Predicated region
    $region34: #{_lambda_.1} parent=1 // pred_check
      _
    $region35: #{_lambda_.1} parent=1 // pred_check_branch
      %36 = sbr.rel (0) target = $region37
    $region36: #{_lambda_.1} parent=1 // pred_region
      _
    $region37: #{_lambda_.1} parent=1 // pred_fallthru
      _
    // Predicated region
    $region38: #{_lambda_.1} parent=1 // pred_check
      _
    $region39: #{_lambda_.1} parent=1 // pred_check_branch
      %38 = sbr.rel (0) target = $region41
    $region40: #{_lambda_.1} parent=1 // pred_region
      _
    $region41: #{_lambda_.1} parent=1 // pred_fallthru
      _
    // Predicated region
    $region42: #{_lambda_.1} parent=1 // pred_check
      _
    $region43: #{_lambda_.1} parent=1 // pred_check_branch
      %40 = sbr.rel (0) target = $region45
    $region44: #{_lambda_.1} parent=1 // pred_region
      _
    $region45: #{_lambda_.1} parent=1 // pred_fallthru
      _
    // Predicated region
    $region46: #{_lambda_.1} parent=1 // pred_check
      _
    $region47: #{_lambda_.1} parent=1 // pred_check_branch
      %42 = sbr.rel (0) target = $region49
    $region48: #{_lambda_.1} parent=1 // pred_region
      _
    $region49: #{_lambda_.1} parent=1 // pred_fallthru
      _
    // Predicated region
    $region50: #{_lambda_.1} parent=1 // pred_check
      _
    $region51: #{_lambda_.1} parent=1 // pred_check_branch
      %44 = sbr.rel (0) target = $region53
    $region52: #{_lambda_.1} parent=1 // pred_region
      _
    $region53: #{_lambda_.1} parent=1 // pred_fallthru
      _
    %v46 = vld [vmem:[%s0] sm:$0xf]
    %v47 = vld [vmem:[%s1] sm:$0xf]
    %v48 = vld [vmem:[%s1 + $0x4] sm:$0xf]
    %v49 = vld [vmem:[%s2] sm:$0x1]
    %v51 = vlaneseq
    %v52 = vshrl.u32 %v51, 7
    %v53 = vsub.s32 0, %v52
    %v54 = vrot.slane %v49, %v53
    %v58 = vunpack.c.l.b16 %v47
    %v59 = vunpack.c.l.b16 %v48
    %v60 = vpack.c.b16 %v59, %v58
    %vm62 = vcmask 130048
    %v64 = vsel %vm62, %v46, 0
    %66 = vmatprep.subr.bf16.mxu0 0
    %67 = vmatpush1.bf16.msra.mxu0 %v60
    %68 = vmatprep.subr.bf16.mxu0 0
    %69 = vmatpush1.bf16.msra.mxu0 0
    %70 = vmatprep.subr.bf16.mxu0 0
    %71 = vmatpush1.bf16.msra.mxu0 0
    %72 = vmatprep.subr.bf16.mxu0 0
    %73 = vmatpush1.bf16.msra.mxu0 0
    %74 = vmatprep.subr.bf16.mxu0 0
    %75 = vmatpush1.bf16.msra.mxu0 0
    %76 = vmatprep.subr.bf16.mxu0 0
    %77 = vmatpush1.bf16.msra.mxu0 0
    %78 = vmatprep.subr.bf16.mxu0 0
    %79 = vmatpush1.bf16.msra.mxu0 0
    %80 = vmatprep.subr.bf16.mxu0 0
    %81 = vmatpush1.bf16.msra.mxu0 0
    %82 = vmatprep.subr.bf16.mxu0 0
    %83 = vmatpush1.bf16.msra.mxu0 0
    %84 = vmatprep.subr.bf16.mxu0 0
    %85 = vmatpush1.bf16.msra.mxu0 0
    %86 = vmatprep.subr.bf16.mxu0 0
    %87 = vmatpush1.bf16.msra.mxu0 0
    %88 = vmatprep.subr.bf16.mxu0 0
    %89 = vmatpush1.bf16.msra.mxu0 0
    %90 = vmatprep.subr.bf16.mxu0 0
    %91 = vmatpush1.bf16.msra.mxu0 0
    %92 = vmatprep.subr.bf16.mxu0 0
    %93 = vmatpush1.bf16.msra.mxu0 0
    %94 = vmatprep.subr.bf16.mxu0 0
    %95 = vmatpush1.bf16.msra.mxu0 0
    %96 = vmatprep.subr.bf16.mxu0 0
    %97 = vmatpush1.bf16.msra.mxu0 0
    %98 = vmatprep.mubr.bf16.mxu0 0
    %99 = vmatmul.mubr.bf16.gmra.mrb[0].mxu0 %v64
    %v100 = vpop.f32.mrb[0].mxu0
    %v101 = vadd.f32 %v54, %v100
    %v102 = vpop.f32.mrb[0].mxu0
    %v103 = vpop.f32.mrb[0].mxu0
    %v104 = vpop.f32.mrb[0].mxu0
    %105 = vdwg.mxu0
    %v106 = vmul.f32 %v101, %v101
    %v107 = vmul.f32 %v101, %v106
    %v108 = vmul.f32 %v107, 0.044715
    %v109 = vadd.f32 %v101, %v108
    %v110 = vmul.f32 %v109, 0.7978846
    %v111 = vtanh.pop %v110
    %v112 = vadd.f32 %v111, 1.0
    %v113 = vmul.f32 %v112, 0.5
    %v114 = vmul.f32 %v101, %v113
    %v115 = vpack.c.bf16 %v114, %v114
    %v116 = vld [vmem:[%s3] sm:$0xf]
    %v117 = vld [vmem:[%s3 + $0x4] sm:$0xf]
    %v118 = vld [vmem:[%s3 + $0x8] sm:$0xf]
    %v119 = vld [vmem:[%s3 + $0xc] sm:$0xf]
    %v120 = vld [vmem:[%s3 + $0x10] sm:$0xf]
    %v121 = vld [vmem:[%s3 + $0x14] sm:$0xf]
    %v122 = vld [vmem:[%s3 + $0x18] sm:$0xf]
    %v123 = vld [vmem:[%s3 + $0x1c] sm:$0xf]
    %v124 = vld [vmem:[%s3 + $0x20] sm:$0xf]
    %v125 = vld [vmem:[%s3 + $0x24] sm:$0xf]
    %v126 = vld [vmem:[%s3 + $0x28] sm:$0xf]
    %v127 = vld [vmem:[%s3 + $0x2c] sm:$0xf]
    %v128 = vld [vmem:[%s3 + $0x30] sm:$0xf]
    %v129 = vld [vmem:[%s3 + $0x34] sm:$0xf]
    %v130 = vld [vmem:[%s3 + $0x38] sm:$0xf]
    %v131 = vld [vmem:[%s3 + $0x3c] sm:$0xf]
    %v132 = vld [vmem:[%s4] sm:$0x1]
    %v134 = vlaneseq
    %v135 = vshrl.u32 %v134, 7
    %v136 = vsub.s32 0, %v135
    %v137 = vrot.slane %v132, %v136
    %v155 = vunpack.c.l.b16 %v116
    %v156 = vunpack.c.l.b16 %v117
    %v157 = vunpack.c.l.b16 %v118
    %v158 = vunpack.c.l.b16 %v119
    %v159 = vunpack.c.l.b16 %v120
    %v160 = vunpack.c.l.b16 %v121
    %v161 = vunpack.c.l.b16 %v122
    %v162 = vunpack.c.l.b16 %v123
    %v163 = vunpack.c.l.b16 %v124
    %v164 = vunpack.c.l.b16 %v125
    %v165 = vunpack.c.l.b16 %v126
    %v166 = vunpack.c.l.b16 %v127
    %v167 = vunpack.c.l.b16 %v128
    %v168 = vunpack.c.l.b16 %v129
    %v169 = vunpack.c.l.b16 %v130
    %v170 = vunpack.c.l.b16 %v131
    %v171 = vpack.c.b16 %v156, %v155
    %v172 = vpack.c.b16 %v158, %v157
    %v173 = vpack.c.b16 %v160, %v159
    %v174 = vpack.c.b16 %v162, %v161
    %v175 = vpack.c.b16 %v164, %v163
    %v176 = vpack.c.b16 %v166, %v165
    %v177 = vpack.c.b16 %v168, %v167
    %v178 = vpack.c.b16 %v170, %v169
    %187 = vmatprep.subr.bf16.mxu0 0
    %188 = vmatpush1.bf16.msra.mxu0 %v171
    %189 = vmatprep.subr.bf16.mxu0 0
    %190 = vmatpush1.bf16.msra.mxu0 %v172
    %191 = vmatprep.subr.bf16.mxu0 0
    %192 = vmatpush1.bf16.msra.mxu0 %v173
    %193 = vmatprep.subr.bf16.mxu0 0
    %194 = vmatpush1.bf16.msra.mxu0 %v174
    %195 = vmatprep.subr.bf16.mxu0 0
    %196 = vmatpush1.bf16.msra.mxu0 %v175
    %197 = vmatprep.subr.bf16.mxu0 0
    %198 = vmatpush1.bf16.msra.mxu0 %v176
    %199 = vmatprep.subr.bf16.mxu0 0
    %200 = vmatpush1.bf16.msra.mxu0 %v177
    %201 = vmatprep.subr.bf16.mxu0 0
    %202 = vmatpush1.bf16.msra.mxu0 %v178
    %203 = vmatprep.subr.bf16.mxu0 0
    %204 = vmatpush1.bf16.msra.mxu0 0
    %205 = vmatprep.subr.bf16.mxu0 0
    %206 = vmatpush1.bf16.msra.mxu0 0
    %207 = vmatprep.subr.bf16.mxu0 0
    %208 = vmatpush1.bf16.msra.mxu0 0
    %209 = vmatprep.subr.bf16.mxu0 0
    %210 = vmatpush1.bf16.msra.mxu0 0
    %211 = vmatprep.subr.bf16.mxu0 0
    %212 = vmatpush1.bf16.msra.mxu0 0
    %213 = vmatprep.subr.bf16.mxu0 0
    %214 = vmatpush1.bf16.msra.mxu0 0
    %215 = vmatprep.subr.bf16.mxu0 0
    %216 = vmatpush1.bf16.msra.mxu0 0
    %217 = vmatprep.subr.bf16.mxu0 0
    %218 = vmatpush1.bf16.msra.mxu0 0
    %219 = vmatprep.mubr.bf16.mxu0 0
    %220 = vmatmul.mubr.bf16.gmra.mrb[0].mxu0 %v115
    %v221 = vpop.f32.mrb[0].mxu0
    %v222 = vadd.f32 %v137, %v221
    %v223 = vpop.f32.mrb[0].mxu0
    %v224 = vpop.f32.mrb[0].mxu0
    %v225 = vpop.f32.mrb[0].mxu0
    %226 = vdwg.mxu0
    %v227 = vld [vmem:[%s5] sm:$0xf]
    %v228 = vld [vmem:[%s5 + $0x4] sm:$0xf]
    %v229 = vld [vmem:[%s6] sm:$0x1]
    %v231 = vlaneseq
    %v232 = vshrl.u32 %v231, 7
    %v233 = vsub.s32 0, %v232
    %v234 = vrot.slane %v229, %v233
    %v238 = vunpack.c.l.b16 %v227
    %v239 = vunpack.c.l.b16 %v228
    %v240 = vpack.c.b16 %v239, %v238
    %242 = vmatprep.subr.bf16.mxu0 0
    %243 = vmatpush1.bf16.msra.mxu0 %v240
    %244 = vmatprep.subr.bf16.mxu0 0
    %245 = vmatpush1.bf16.msra.mxu0 0
    %246 = vmatprep.subr.bf16.mxu0 0
    %247 = vmatpush1.bf16.msra.mxu0 0
    %248 = vmatprep.subr.bf16.mxu0 0
    %249 = vmatpush1.bf16.msra.mxu0 0
    %250 = vmatprep.subr.bf16.mxu0 0
    %251 = vmatpush1.bf16.msra.mxu0 0
    %252 = vmatprep.subr.bf16.mxu0 0
    %253 = vmatpush1.bf16.msra.mxu0 0
    %254 = vmatprep.subr.bf16.mxu0 0
    %255 = vmatpush1.bf16.msra.mxu0 0
    %256 = vmatprep.subr.bf16.mxu0 0
    %257 = vmatpush1.bf16.msra.mxu0 0
    %258 = vmatprep.subr.bf16.mxu0 0
    %259 = vmatpush1.bf16.msra.mxu0 0
    %260 = vmatprep.subr.bf16.mxu0 0
    %261 = vmatpush1.bf16.msra.mxu0 0
    %262 = vmatprep.subr.bf16.mxu0 0
    %263 = vmatpush1.bf16.msra.mxu0 0
    %264 = vmatprep.subr.bf16.mxu0 0
    %265 = vmatpush1.bf16.msra.mxu0 0
    %266 = vmatprep.subr.bf16.mxu0 0
    %267 = vmatpush1.bf16.msra.mxu0 0
    %268 = vmatprep.subr.bf16.mxu0 0
    %269 = vmatpush1.bf16.msra.mxu0 0
    %270 = vmatprep.subr.bf16.mxu0 0
    %271 = vmatpush1.bf16.msra.mxu0 0
    %272 = vmatprep.subr.bf16.mxu0 0
    %273 = vmatpush1.bf16.msra.mxu0 0
    %274 = vmatprep.mubr.bf16.mxu0 0
    %275 = vmatmul.mubr.bf16.gmra.mrb[0].mxu0 %v64
    %v276 = vpop.f32.mrb[0].mxu0
    %v277 = vadd.f32 %v234, %v276
    %v278 = vpop.f32.mrb[0].mxu0
    %v279 = vpop.f32.mrb[0].mxu0
    %v280 = vpop.f32.mrb[0].mxu0
    %281 = vdwg.mxu0
    %v282 = vld [vmem:[%s7] sm:$0xf]
    %v283 = vpack.c.bf16 %v277, %v277
    %vm284 = vcmask 64512
    %v286 = vsel %vm284, %v282, 0
    %vm288 = vcmask 1043456
    %v290 = vsel %vm288, %v283, 0
    %292 = vmatprep.subr.bf16.mxu0 0
    %293 = vmatpush1.bf16.msra.mxu0 %v290
    %294 = vmatprep.subr.bf16.mxu0 0
    %295 = vmatpush1.bf16.msra.mxu0 0
    %296 = vmatprep.subr.bf16.mxu0 0
    %297 = vmatpush1.bf16.msra.mxu0 0
    %298 = vmatprep.subr.bf16.mxu0 0
    %299 = vmatpush1.bf16.msra.mxu0 0
    %300 = vmatprep.subr.bf16.mxu0 0
    %301 = vmatpush1.bf16.msra.mxu0 0
    %302 = vmatprep.subr.bf16.mxu0 0
    %303 = vmatpush1.bf16.msra.mxu0 0
    %304 = vmatprep.subr.bf16.mxu0 0
    %305 = vmatpush1.bf16.msra.mxu0 0
    %306 = vmatprep.subr.bf16.mxu0 0
    %307 = vmatpush1.bf16.msra.mxu0 0
    %308 = vmatprep.subr.bf16.mxu0 0
    %309 = vmatpush1.bf16.msra.mxu0 0
    %310 = vmatprep.subr.bf16.mxu0 0
    %311 = vmatpush1.bf16.msra.mxu0 0
    %312 = vmatprep.subr.bf16.mxu0 0
    %313 = vmatpush1.bf16.msra.mxu0 0
    %314 = vmatprep.subr.bf16.mxu0 0
    %315 = vmatpush1.bf16.msra.mxu0 0
    %316 = vmatprep.subr.bf16.mxu0 0
    %317 = vmatpush1.bf16.msra.mxu0 0
    %318 = vmatprep.subr.bf16.mxu0 0
    %319 = vmatpush1.bf16.msra.mxu0 0
    %320 = vmatprep.subr.bf16.mxu0 0
    %321 = vmatpush1.bf16.msra.mxu0 0
    %322 = vmatprep.subr.bf16.mxu0 0
    %323 = vmatpush1.bf16.msra.mxu0 0
    %324 = vmatprep.mubr.bf16.mxu0 0
    %325 = vmatmul.mubr.bf16.gmra.mrb[0].mxu0 %v286
    %v326 = vpop.f32.mrb[0].mxu0
    %v327 = vadd.f32 0.0, %v326
    %v328 = vpop.f32.mrb[0].mxu0
    %v329 = vpop.f32.mrb[0].mxu0
    %v330 = vpop.f32.mrb[0].mxu0
    %331 = vdwg.mxu0
    %v332 = vmul.f32 %v327, %v327
    %v333 = vmul.f32 %v327, %v332
    %v334 = vmul.f32 %v333, 0.044715
    %v335 = vadd.f32 %v327, %v334
    %v336 = vmul.f32 %v335, 0.7978846
    %v337 = vtanh.pop %v336
    %v338 = vadd.f32 %v337, 1.0
    %v339 = vmul.f32 %v338, 0.5
    %v340 = vmul.f32 %v327, %v339
    %v341 = vpack.c.bf16 %v340, %v340
    %v342 = vld [vmem:[%s8] sm:$0xf]
    %v343 = vld [vmem:[%s8 + $0x4] sm:$0xf]
    %v344 = vld [vmem:[%s8 + $0x8] sm:$0xf]
    %v345 = vld [vmem:[%s8 + $0xc] sm:$0xf]
    %v350 = vunpack.c.l.b16 %v342
    %v351 = vunpack.c.l.b16 %v343
    %v352 = vunpack.c.l.b16 %v344
    %v353 = vunpack.c.l.b16 %v345
    %v354 = vpack.c.b16 %v351, %v350
    %v355 = vpack.c.b16 %v353, %v352
    %vm358 = vcmask 261120
    %v360 = vsel %vm358, %v341, 0
    %362 = vmatprep.subr.bf16.mxu0 0
    %363 = vmatpush1.bf16.msra.mxu0 %v354
    %364 = vmatprep.subr.bf16.mxu0 0
    %365 = vmatpush1.bf16.msra.mxu0 %v355
    %366 = vmatprep.subr.bf16.mxu0 0
    %367 = vmatpush1.bf16.msra.mxu0 0
    %368 = vmatprep.subr.bf16.mxu0 0
    %369 = vmatpush1.bf16.msra.mxu0 0
    %370 = vmatprep.subr.bf16.mxu0 0
    %371 = vmatpush1.bf16.msra.mxu0 0
    %372 = vmatprep.subr.bf16.mxu0 0
    %373 = vmatpush1.bf16.msra.mxu0 0
    %374 = vmatprep.subr.bf16.mxu0 0
    %375 = vmatpush1.bf16.msra.mxu0 0
    %376 = vmatprep.subr.bf16.mxu0 0
    %377 = vmatpush1.bf16.msra.mxu0 0
    %378 = vmatprep.subr.bf16.mxu0 0
    %379 = vmatpush1.bf16.msra.mxu0 0
    %380 = vmatprep.subr.bf16.mxu0 0
    %381 = vmatpush1.bf16.msra.mxu0 0
    %382 = vmatprep.subr.bf16.mxu0 0
    %383 = vmatpush1.bf16.msra.mxu0 0
    %384 = vmatprep.subr.bf16.mxu0 0
    %385 = vmatpush1.bf16.msra.mxu0 0
    %386 = vmatprep.subr.bf16.mxu0 0
    %387 = vmatpush1.bf16.msra.mxu0 0
    %388 = vmatprep.subr.bf16.mxu0 0
    %389 = vmatpush1.bf16.msra.mxu0 0
    %390 = vmatprep.subr.bf16.mxu0 0
    %391 = vmatpush1.bf16.msra.mxu0 0
    %392 = vmatprep.subr.bf16.mxu0 0
    %393 = vmatpush1.bf16.msra.mxu0 0
    %394 = vmatprep.mubr.bf16.mxu0 0
    %395 = vmatmul.mubr.bf16.gmra.mrb[0].mxu0 %v360
    %v396 = vpop.f32.mrb[0].mxu0
    %v397 = vadd.f32 0.0, %v396
    %v398 = vpop.f32.mrb[0].mxu0
    %v399 = vpop.f32.mrb[0].mxu0
    %v400 = vpop.f32.mrb[0].mxu0
    %401 = vdwg.mxu0
    %v402 = vadd.f32 %v222, %v397
    %v403 = vpack.c.bf16 %v402, %v402
    %v404 = vld [vmem:[%s9] sm:$0xf]
    %v405 = vld [vmem:[%s9 + $0x4] sm:$0xf]
    %v406 = vld [vmem:[%s9 + $0x8] sm:$0xf]
    %v407 = vld [vmem:[%s9 + $0xc] sm:$0xf]
    %v408 = vld [vmem:[%s9 + $0x10] sm:$0xf]
    %v409 = vld [vmem:[%s9 + $0x14] sm:$0xf]
    %v410 = vld [vmem:[%s9 + $0x18] sm:$0xf]
    %v411 = vld [vmem:[%s9 + $0x1c] sm:$0xf]
    %v412 = vld [vmem:[%s9 + $0x20] sm:$0xf]
    %v413 = vld [vmem:[%s9 + $0x24] sm:$0xf]
    %v414 = vld [vmem:[%s9 + $0x28] sm:$0xf]
    %v415 = vld [vmem:[%s9 + $0x2c] sm:$0xf]
    %v416 = vld [vmem:[%s9 + $0x30] sm:$0xf]
    %v417 = vld [vmem:[%s9 + $0x34] sm:$0xf]
    %v418 = vld [vmem:[%s9 + $0x38] sm:$0xf]
    %v419 = vld [vmem:[%s9 + $0x3c] sm:$0xf]
    %v420 = vld [vmem:[%s10] sm:$0x1]
    %v422 = vlaneseq
    %v423 = vshrl.u32 %v422, 7
    %v424 = vsub.s32 0, %v423
    %v425 = vrot.slane %v420, %v424
    %v443 = vunpack.c.l.b16 %v404
    %v444 = vunpack.c.l.b16 %v405
    %v445 = vunpack.c.l.b16 %v406
    %v446 = vunpack.c.l.b16 %v407
    %v447 = vunpack.c.l.b16 %v408
    %v448 = vunpack.c.l.b16 %v409
    %v449 = vunpack.c.l.b16 %v410
    %v450 = vunpack.c.l.b16 %v411
    %v451 = vunpack.c.l.b16 %v412
    %v452 = vunpack.c.l.b16 %v413
    %v453 = vunpack.c.l.b16 %v414
    %v454 = vunpack.c.l.b16 %v415
    %v455 = vunpack.c.l.b16 %v416
    %v456 = vunpack.c.l.b16 %v417
    %v457 = vunpack.c.l.b16 %v418
    %v458 = vunpack.c.l.b16 %v419
    %v459 = vpack.c.b16 %v444, %v443
    %v460 = vpack.c.b16 %v446, %v445
    %v461 = vpack.c.b16 %v448, %v447
    %v462 = vpack.c.b16 %v450, %v449
    %v463 = vpack.c.b16 %v452, %v451
    %v464 = vpack.c.b16 %v454, %v453
    %v465 = vpack.c.b16 %v456, %v455
    %v466 = vpack.c.b16 %v458, %v457
    %475 = vmatprep.subr.bf16.mxu0 0
    %476 = vmatpush1.bf16.msra.mxu0 %v459
    %477 = vmatprep.subr.bf16.mxu0 0
    %478 = vmatpush1.bf16.msra.mxu0 %v460
    %479 = vmatprep.subr.bf16.mxu0 0
    %480 = vmatpush1.bf16.msra.mxu0 %v461
    %481 = vmatprep.subr.bf16.mxu0 0
    %482 = vmatpush1.bf16.msra.mxu0 %v462
    %483 = vmatprep.subr.bf16.mxu0 0
    %484 = vmatpush1.bf16.msra.mxu0 %v463
    %485 = vmatprep.subr.bf16.mxu0 0
    %486 = vmatpush1.bf16.msra.mxu0 %v464
    %487 = vmatprep.subr.bf16.mxu0 0
    %488 = vmatpush1.bf16.msra.mxu0 %v465
    %489 = vmatprep.subr.bf16.mxu0 0
    %490 = vmatpush1.bf16.msra.mxu0 %v466
    %491 = vmatprep.subr.bf16.mxu0 0
    %492 = vmatpush1.bf16.msra.mxu0 0
    %493 = vmatprep.subr.bf16.mxu0 0
    %494 = vmatpush1.bf16.msra.mxu0 0
    %495 = vmatprep.subr.bf16.mxu0 0
    %496 = vmatpush1.bf16.msra.mxu0 0
    %497 = vmatprep.subr.bf16.mxu0 0
    %498 = vmatpush1.bf16.msra.mxu0 0
    %499 = vmatprep.subr.bf16.mxu0 0
    %500 = vmatpush1.bf16.msra.mxu0 0
    %501 = vmatprep.subr.bf16.mxu0 0
    %502 = vmatpush1.bf16.msra.mxu0 0
    %503 = vmatprep.subr.bf16.mxu0 0
    %504 = vmatpush1.bf16.msra.mxu0 0
    %505 = vmatprep.subr.bf16.mxu0 0
    %506 = vmatpush1.bf16.msra.mxu0 0
    %507 = vmatprep.mubr.bf16.mxu0 0
    %508 = vmatmul.mubr.bf16.gmra.mrb[0].mxu0 %v403
    %v509 = vpop.f32.mrb[0].mxu0
    %v510 = vadd.f32 %v425, %v509
    %v511 = vpop.f32.mrb[0].mxu0
    %v512 = vpop.f32.mrb[0].mxu0
    %v513 = vpop.f32.mrb[0].mxu0
    %514 = vdwg.mxu0
    %v515 = vxor.u32 %v510, 2147483648
    %v516 = vmul.f32 %v515, 1.442695
    %v517 = vpow.pop %v516
    %v518 = vadd.f32 %v517, 1.0
    %v519 = vrcp.pop %v518
    %v520 = vmul.f32 1.0, %v519
    %v521 = vmul.f32 %v520, %v222
    %v522 = vsub.f32 1.0, %v520
    %v523 = vmul.f32 %v522, %v397
    %v524 = vadd.f32 %v521, %v523
    %v525 = vpack.c.bf16 %v524, %v524
    %v526 = vld [vmem:[%s11] sm:$0xf]
    %v527 = vld [vmem:[%s11 + $0x4] sm:$0xf]
    %v528 = vld [vmem:[%s11 + $0x8] sm:$0xf]
    %v529 = vld [vmem:[%s11 + $0xc] sm:$0xf]
    %v530 = vld [vmem:[%s11 + $0x10] sm:$0xf]
    %v531 = vld [vmem:[%s11 + $0x14] sm:$0xf]
    %v532 = vld [vmem:[%s11 + $0x18] sm:$0xf]
    %v533 = vld [vmem:[%s11 + $0x1c] sm:$0xf]
    %v534 = vld [vmem:[%s11 + $0x20] sm:$0xf]
    %v535 = vld [vmem:[%s11 + $0x24] sm:$0xf]
    %v536 = vld [vmem:[%s11 + $0x28] sm:$0xf]
    %v537 = vld [vmem:[%s11 + $0x2c] sm:$0xf]
    %v538 = vld [vmem:[%s11 + $0x30] sm:$0xf]
    %v539 = vld [vmem:[%s11 + $0x34] sm:$0xf]
    %v540 = vld [vmem:[%s11 + $0x38] sm:$0xf]
    %v541 = vld [vmem:[%s11 + $0x3c] sm:$0xf]
    %v542 = vld [vmem:[%s12] sm:$0x1]
    %v544 = vlaneseq
    %v545 = vshrl.u32 %v544, 7
    %v546 = vsub.s32 0, %v545
    %v547 = vrot.slane %v542, %v546
    %v565 = vunpack.c.l.b16 %v526
    %v566 = vunpack.c.l.b16 %v527
    %v567 = vunpack.c.l.b16 %v528
    %v568 = vunpack.c.l.b16 %v529
    %v569 = vunpack.c.l.b16 %v530
    %v570 = vunpack.c.l.b16 %v531
    %v571 = vunpack.c.l.b16 %v532
    %v572 = vunpack.c.l.b16 %v533
    %v573 = vunpack.c.l.b16 %v534
    %v574 = vunpack.c.l.b16 %v535
    %v575 = vunpack.c.l.b16 %v536
    %v576 = vunpack.c.l.b16 %v537
    %v577 = vunpack.c.l.b16 %v538
    %v578 = vunpack.c.l.b16 %v539
    %v579 = vunpack.c.l.b16 %v540
    %v580 = vunpack.c.l.b16 %v541
    %v581 = vpack.c.b16 %v566, %v565
    %v582 = vpack.c.b16 %v568, %v567
    %v583 = vpack.c.b16 %v570, %v569
    %v584 = vpack.c.b16 %v572, %v571
    %v585 = vpack.c.b16 %v574, %v573
    %v586 = vpack.c.b16 %v576, %v575
    %v587 = vpack.c.b16 %v578, %v577
    %v588 = vpack.c.b16 %v580, %v579
    %597 = vmatprep.subr.bf16.mxu0 0
    %598 = vmatpush1.bf16.msra.mxu0 %v581
    %599 = vmatprep.subr.bf16.mxu0 0
    %600 = vmatpush1.bf16.msra.mxu0 %v582
    %601 = vmatprep.subr.bf16.mxu0 0
    %602 = vmatpush1.bf16.msra.mxu0 %v583
    %603 = vmatprep.subr.bf16.mxu0 0
    %604 = vmatpush1.bf16.msra.mxu0 %v584
    %605 = vmatprep.subr.bf16.mxu0 0
    %606 = vmatpush1.bf16.msra.mxu0 %v585
    %607 = vmatprep.subr.bf16.mxu0 0
    %608 = vmatpush1.bf16.msra.mxu0 %v586
    %609 = vmatprep.subr.bf16.mxu0 0
    %610 = vmatpush1.bf16.msra.mxu0 %v587
    %611 = vmatprep.subr.bf16.mxu0 0
    %612 = vmatpush1.bf16.msra.mxu0 %v588
    %613 = vmatprep.subr.bf16.mxu0 0
    %614 = vmatpush1.bf16.msra.mxu0 0
    %615 = vmatprep.subr.bf16.mxu0 0
    %616 = vmatpush1.bf16.msra.mxu0 0
    %617 = vmatprep.subr.bf16.mxu0 0
    %618 = vmatpush1.bf16.msra.mxu0 0
    %619 = vmatprep.subr.bf16.mxu0 0
    %620 = vmatpush1.bf16.msra.mxu0 0
    %621 = vmatprep.subr.bf16.mxu0 0
    %622 = vmatpush1.bf16.msra.mxu0 0
    %623 = vmatprep.subr.bf16.mxu0 0
    %624 = vmatpush1.bf16.msra.mxu0 0
    %625 = vmatprep.subr.bf16.mxu0 0
    %626 = vmatpush1.bf16.msra.mxu0 0
    %627 = vmatprep.subr.bf16.mxu0 0
    %628 = vmatpush1.bf16.msra.mxu0 0
    %629 = vmatprep.mubr.bf16.mxu0 0
    %630 = vmatmul.mubr.bf16.gmra.mrb[0].mxu0 %v525
    %v631 = vpop.f32.mrb[0].mxu0
    %v632 = vadd.f32 %v547, %v631
    %v633 = vpop.f32.mrb[0].mxu0
    %v634 = vpop.f32.mrb[0].mxu0
    %v635 = vpop.f32.mrb[0].mxu0
    %636 = vdwg.mxu0
    %637 = vst [vmem:[#allocation2] sm:$0xff] %v632
    // Predicated region
    $region54: #{_lambda_.1} parent=1 // pred_check
      _
    $region55: #{_lambda_.1} parent=1 // pred_check_branch
      %639 = sbr.rel (0) target = $region57
    $region56: #{_lambda_.1} parent=1 // pred_region
      %s641 = ssub.s32 128, 128
      %642 = vsyncadd [#allocation3], %s641
      %s644 = sshll.u32 [#allocation2], 4
      %s645 = int_to_ptr.vmem [resolvable:$true] %s644
      %647 = dma.vmem_to_hbm [thread:$0]  %s645, 128, %s13, [#allocation3]
    $region57: #{_lambda_.1} parent=1 // pred_fallthru
      _
    // Predicated region
    $region58: #{_lambda_.1} parent=1 // pred_check
      _
    $region59: #{_lambda_.1} parent=1 // pred_check_branch
      %649 = sbr.rel (0) target = $region61
    $region60: #{_lambda_.1} parent=1 // pred_region
      %650 = dma.done [#allocation3], 128
    $region61: #{_lambda_.1} parent=1 // pred_fallthru
      _
    %651 = vsyncpa [#allocation3], 1

</llo_original>
